<compile_context>
chip_gen: v7x
topology: tpu7x:2x2x1
jax: 0.10.0
libtpu: 0.0.40
codegen_flags: <defaults>
</compile_context>

<pallas_src>
import jax
import jax.numpy as jnp
from jax.experimental import pallas as pl
from jax.experimental.pallas import tpu as pltpu

HIDDEN = 64     # logical hidden width (matches nn.Linear(state_size, 64))
H_PAD = 128     # lane-dense padded hidden width
A_PAD = 128     # lane-dense padded output width


def _cdiv(a, b):
    return -(-a // b)


def _round_up(n, m):
    return ((n + m - 1) // m) * m


def qnet_kernel(x_ref, w1_ref, b1_ref, w2_ref, b2_ref, w3_ref, b3_ref, o_ref):
    """One batch tile of the fused MLP. Weights/biases are VMEM-resident full blocks."""
    x = x_ref[...]
    # dense1 + relu1 (MXU in weight dtype, f32 accumulation; bias/ReLU in f32)
    h1 = jnp.dot(x.astype(w1_ref.dtype), w1_ref[...],
                 preferred_element_type=jnp.float32) + b1_ref[...]
    h1 = jnp.maximum(h1, 0.0)
    # dense2 + relu2
    h2 = jnp.dot(h1.astype(w2_ref.dtype), w2_ref[...],
                 preferred_element_type=jnp.float32) + b2_ref[...]
    h2 = jnp.maximum(h2, 0.0)
    # dense3 (lane-dense 128-wide output; caller slices / masks to action_size)
    o_ref[...] = (jnp.dot(h2.astype(w3_ref.dtype), w3_ref[...],
                          preferred_element_type=jnp.float32)
                  + b3_ref[...]).astype(o_ref.dtype)


def _choose_tiling(B, max_tile):
    """Padding-aware TB: near-divisor tiles, multiples of 16 (bf16-safe sublanes),
    and >= 2 tiles when the batch is big enough (keeps both v7x TCs busy)."""
    n_tiles = max(_cdiv(B, max_tile), min(2, _cdiv(B, 16)))
    TB = _round_up(_cdiv(B, n_tiles), 16)
    B_pad = n_tiles * TB
    return TB, n_tiles, B_pad


def qnetwork_forward(x, padded_params, action_size, *, max_tile=2048,
                     out_dtype=None, unpad=True):
    """Fused QNetwork forward. `padded_params` come from pad_params().

    out_dtype=None -> output dtype follows the weight dtype (bf16 weights => bf16
    output, halving writeback traffic). unpad=False returns the (B_pad, 128)
    padded output so a consumer can fuse the slice / argmax and avoid an extra
    full read+write of the padded tensor in XLA.
    """
    w1, b1, w2, b2, w3, b3 = padded_params
    B, S = x.shape
    if out_dtype is None:
        out_dtype = w1.dtype
    out_itemsize = jnp.dtype(out_dtype).itemsize
    w_itemsize = jnp.dtype(w1.dtype).itemsize

    TB, num_tiles, B_pad = _choose_tiling(B, max_tile)
    if B_pad != B:
        x = jnp.pad(x, ((0, B_pad - B), (0, 0)))

    flops = 2 * B_pad * (S * H_PAD + H_PAD * H_PAD + H_PAD * A_PAD)
    bytes_accessed = (
        B_pad * S * 4
        + (w1.size + w2.size + w3.size) * w_itemsize
        + (b1.size + b2.size + b3.size) * 4
        + B_pad * A_PAD * out_itemsize)

    # VMEM budget tracks the real requirement (double-buffered x/out tiles +
    # weights, 2x safety margin). No fixed 32 MiB clip that could under-provision.
    tile_bytes = 2 * TB * S * 4 + 2 * TB * A_PAD * out_itemsize
    weight_bytes = 2 * ((w1.size + w2.size + w3.size) * w_itemsize
                        + (b1.size + b2.size + b3.size) * 4)
    vmem_limit = int(max(2 * (tile_bytes + weight_bytes), 1 << 20))

    def full(a):
        # Full-array block; constant block index => fetched once, stays VMEM-resident.
        return pl.BlockSpec(a.shape, lambda i: (0,) * a.ndim)

    out = pl.pallas_call(
        qnet_kernel,
        out_shape=jax.ShapeDtypeStruct((B_pad, A_PAD), out_dtype),
        grid=(num_tiles,),
        in_specs=[pl.BlockSpec((TB, S), lambda i: (i, 0)),
                  full(w1), full(b1), full(w2), full(b2), full(w3), full(b3)],
        out_specs=pl.BlockSpec((TB, A_PAD), lambda i: (i, 0)),
        compiler_params=pltpu.CompilerParams(
            dimension_semantics=("parallel",),
            vmem_limit_bytes=vmem_limit),
        cost_estimate=pl.CostEstimate(flops=flops, transcendentals=0,
                                      bytes_accessed=bytes_accessed),
    )(x, w1, b1, w2, b2, w3, b3)

    if unpad:
        return out[:B, :action_size]
    return out  # consumer slices [:B, :action_size] / fuses argmax downstream


def init_params(key, state_size, action_size, hidden=HIDDEN):
    """Unpadded params mimicking nn.Linear default init (uniform +-1/sqrt(fan_in)).
    Weights stored as (in, out) so forward is x @ W + b."""
    ks = jax.random.split(key, 6)

    def linear(kw, kb, fan_in, fan_out):
        bound = 1.0 / jnp.sqrt(jnp.float32(fan_in))
        w = jax.random.uniform(kw, (fan_in, fan_out), jnp.float32, -bound, bound)
        b = jax.random.uniform(kb, (fan_out,), jnp.float32, -bound, bound)
        return w, b

    w1, b1 = linear(ks[0], ks[1], state_size, hidden)
    w2, b2 = linear(ks[2], ks[3], hidden, hidden)
    w3, b3 = linear(ks[4], ks[5], hidden, action_size)
    return (w1, b1, w2, b2, w3, b3)


def pad_params(params, weight_dtype=jnp.bfloat16):
    """Zero-pad hidden->128 and actions->128 so every tile is lane-dense.
    Padded rows/columns are exact zeros, so the first `action_size` output lanes
    are unchanged. Weights default to bf16 (MXU-native on v5e/v6e/v7x); biases
    stay f32 (accumulation / bias-add / ReLU are f32 in the kernel)."""
    w1, b1, w2, b2, w3, b3 = params
    S = w1.shape[0]

    def padw(w, rows, cols):
        return jnp.pad(w, ((0, rows - w.shape[0]),
                           (0, cols - w.shape[1]))).astype(weight_dtype)

    def padb(b, cols):
        return jnp.pad(b.reshape(1, -1),
                       ((0, 0), (0, cols - b.shape[0]))).astype(jnp.float32)

    return (padw(w1, S, H_PAD), padb(b1, H_PAD),
            padw(w2, H_PAD, H_PAD), padb(b2, H_PAD),
            padw(w3, H_PAD, A_PAD), padb(b3, A_PAD))


def qnetwork_ref(x, params):
    """Pure-JAX reference on the original (unpadded) params."""
    w1, b1, w2, b2, w3, b3 = params
    h1 = jnp.maximum(x @ w1 + b1, 0.0)
    h2 = jnp.maximum(h1 @ w2 + b2, 0.0)
    return h2 @ w3 + b3


if __name__ == "__main__":
    key = jax.random.PRNGKey(0)
    k_x, k_p, k_x2 = jax.random.split(key, 3)

    state_size, action_size = 8, 4
    raw_params = init_params(k_p, state_size, action_size)

    # f32 weights + f32 output: tight tolerance, single small tile.
    params_f32 = pad_params(raw_params, jnp.float32)
    x = jax.random.normal(k_x, (8, state_size), jnp.float32)
    out = jax.block_until_ready(qnetwork_forward(x, params_f32, action_size))
    ref = qnetwork_ref(x, raw_params)
    assert out.shape == (8, action_size)
    assert jnp.allclose(out, ref, atol=1e-5, rtol=1e-5)

    # Default bf16 weights + bf16 output, B=600: padding-aware tiling gives
    # 2 tiles of 304 rows (B_pad=608, not 1024) -> both v7x TCs busy, minimal waste.
    params_bf16 = pad_params(raw_params)  # bf16 by default on all generations
    x2 = jax.random.normal(k_x2, (600, state_size), jnp.float32)
    ref2 = qnetwork_ref(x2, raw_params)
    out2 = jax.block_until_ready(qnetwork_forward(x2, params_bf16, action_size))
    assert out2.shape == (600, action_size)
    assert jnp.allclose(out2.astype(jnp.float32), ref2, atol=5e-2, rtol=5e-2)

    # Padded-output path (no post-kernel slice): consumer slices/fuses downstream.
    out2_pad = jax.block_until_ready(
        qnetwork_forward(x2, params_bf16, action_size, unpad=False))
    assert out2_pad.shape[1] == A_PAD and out2_pad.shape[0] >= 600
    assert jnp.allclose(out2_pad[:600, :action_size].astype(jnp.float32), ref2,
                        atol=5e-2, rtol=5e-2)

    print("KERNEL_OK")
</pallas_src>

<mosaic_0001>
module attributes {stable_mosaic.version = 11 : i64} {
  func.func @qnet_kernel(%arg0: i32, %arg1: memref<16x8xf32, #tpu.memory_space<vmem>>, %arg2: memref<8x128xf32, #tpu.memory_space<vmem>>, %arg3: memref<1x128xf32, #tpu.memory_space<vmem>>, %arg4: memref<128x128xf32, #tpu.memory_space<vmem>>, %arg5: memref<1x128xf32, #tpu.memory_space<vmem>>, %arg6: memref<128x128xf32, #tpu.memory_space<vmem>>, %arg7: memref<1x128xf32, #tpu.memory_space<vmem>>, %arg8: memref<16x128xf32, #tpu.memory_space<vmem>>) attributes {dimension_semantics = [#tpu.dimension_semantics<parallel>], iteration_bounds = array<i64: 1>, scalar_prefetch = 0 : i64, scratch_operands = 0 : i64, tpu.core_type = #tpu.core_type<tc>, window_params = [{transform_indices = @transform_0, window_bounds = array<i64: 16, 8>}, {pipeline_mode = #tpu.pipeline_mode<synchronous>, transform_indices = @transform_1, window_bounds = array<i64: 8, 128>}, {pipeline_mode = #tpu.pipeline_mode<synchronous>, transform_indices = @transform_2, window_bounds = array<i64: 1, 128>}, {pipeline_mode = #tpu.pipeline_mode<synchronous>, transform_indices = @transform_3, window_bounds = array<i64: 128, 128>}, {pipeline_mode = #tpu.pipeline_mode<synchronous>, transform_indices = @transform_4, window_bounds = array<i64: 1, 128>}, {pipeline_mode = #tpu.pipeline_mode<synchronous>, transform_indices = @transform_5, window_bounds = array<i64: 128, 128>}, {pipeline_mode = #tpu.pipeline_mode<synchronous>, transform_indices = @transform_6, window_bounds = array<i64: 1, 128>}, {transform_indices = @transform_7, window_bounds = array<i64: 16, 128>}]} {
    %c0 = arith.constant 0 : index
    %c0_0 = arith.constant 0 : index
    %0 = vector.load %arg1[%c0, %c0_0] : memref<16x8xf32, #tpu.memory_space<vmem>>, vector<16x8xf32>
    %c0_1 = arith.constant 0 : index
    %c0_2 = arith.constant 0 : index
    %1 = vector.load %arg2[%c0_1, %c0_2] : memref<8x128xf32, #tpu.memory_space<vmem>>, vector<8x128xf32>
    %cst = arith.constant dense<0.000000e+00> : vector<16x128xf32>
    %2 = tpu.matmul %0, %1, %cst {dimension_numbers = #tpu.dot_dimension_numbers<[1], [0], [0], [1], [0, 0, 1, 1], [], []>} : vector<16x8xf32>, vector<8x128xf32>, vector<16x128xf32> -> vector<16x128xf32>
    %c0_3 = arith.constant 0 : index
    %c0_4 = arith.constant 0 : index
    %3 = vector.load %arg3[%c0_3, %c0_4] : memref<1x128xf32, #tpu.memory_space<vmem>>, vector<1x128xf32>
    %4 = vector.broadcast %3 : vector<1x128xf32> to vector<16x128xf32>
    %5 = arith.addf %2, %4 : vector<16x128xf32>
    %cst_5 = arith.constant 0.000000e+00 : f32
    %6 = vector.broadcast %cst_5 : f32 to vector<16x128xf32>
    %7 = arith.maximumf %5, %6 : vector<16x128xf32>
    %c0_6 = arith.constant 0 : index
    %c0_7 = arith.constant 0 : index
    %8 = vector.load %arg4[%c0_6, %c0_7] : memref<128x128xf32, #tpu.memory_space<vmem>>, vector<128x128xf32>
    %cst_8 = arith.constant dense<0.000000e+00> : vector<16x128xf32>
    %9 = tpu.matmul %7, %8, %cst_8 {dimension_numbers = #tpu.dot_dimension_numbers<[1], [0], [0], [1], [0, 0, 1, 1], [], []>} : vector<16x128xf32>, vector<128x128xf32>, vector<16x128xf32> -> vector<16x128xf32>
    %c0_9 = arith.constant 0 : index
    %c0_10 = arith.constant 0 : index
    %10 = vector.load %arg5[%c0_9, %c0_10] : memref<1x128xf32, #tpu.memory_space<vmem>>, vector<1x128xf32>
    %11 = vector.broadcast %10 : vector<1x128xf32> to vector<16x128xf32>
    %12 = arith.addf %9, %11 : vector<16x128xf32>
    %cst_11 = arith.constant 0.000000e+00 : f32
    %13 = vector.broadcast %cst_11 : f32 to vector<16x128xf32>
    %14 = arith.maximumf %12, %13 : vector<16x128xf32>
    %c0_12 = arith.constant 0 : index
    %c0_13 = arith.constant 0 : index
    %15 = vector.load %arg6[%c0_12, %c0_13] : memref<128x128xf32, #tpu.memory_space<vmem>>, vector<128x128xf32>
    %cst_14 = arith.constant dense<0.000000e+00> : vector<16x128xf32>
    %16 = tpu.matmul %14, %15, %cst_14 {dimension_numbers = #tpu.dot_dimension_numbers<[1], [0], [0], [1], [0, 0, 1, 1], [], []>} : vector<16x128xf32>, vector<128x128xf32>, vector<16x128xf32> -> vector<16x128xf32>
    %c0_15 = arith.constant 0 : index
    %c0_16 = arith.constant 0 : index
    %17 = vector.load %arg7[%c0_15, %c0_16] : memref<1x128xf32, #tpu.memory_space<vmem>>, vector<1x128xf32>
    %18 = vector.broadcast %17 : vector<1x128xf32> to vector<16x128xf32>
    %19 = arith.addf %16, %18 : vector<16x128xf32>
    %c0_17 = arith.constant 0 : index
    %c0_18 = arith.constant 0 : index
    %20 = vector.load %arg8[%c0_17, %c0_18] : memref<16x128xf32, #tpu.memory_space<vmem>>, vector<16x128xf32>
    tpu.vector_store %arg8[%c0_17, %c0_18], %19 {strides = array<i32>} : memref<16x128xf32, #tpu.memory_space<vmem>>, vector<16x128xf32>,
    return
  }
  func.func @transform_0(%arg0: i32) -> (i32, i32) {
    %c0_i32 = arith.constant 0 : i32
    %c0_i32_0 = arith.constant 0 : i32
    return %arg0, %c0_i32 : i32, i32
  }
  func.func @transform_1(%arg0: i32) -> (i32, i32) {
    %c0_i32 = arith.constant 0 : i32
    %c0_i32_0 = arith.constant 0 : i32
    %c0_i32_1 = arith.constant 0 : i32
    return %c0_i32, %c0_i32_0 : i32, i32
  }
  func.func @transform_2(%arg0: i32) -> (i32, i32) {
    %c0_i32 = arith.constant 0 : i32
    %c0_i32_0 = arith.constant 0 : i32
    %c0_i32_1 = arith.constant 0 : i32
    return %c0_i32, %c0_i32_0 : i32, i32
  }
  func.func @transform_3(%arg0: i32) -> (i32, i32) {
    %c0_i32 = arith.constant 0 : i32
    %c0_i32_0 = arith.constant 0 : i32
    %c0_i32_1 = arith.constant 0 : i32
    return %c0_i32, %c0_i32_0 : i32, i32
  }
  func.func @transform_4(%arg0: i32) -> (i32, i32) {
    %c0_i32 = arith.constant 0 : i32
    %c0_i32_0 = arith.constant 0 : i32
    %c0_i32_1 = arith.constant 0 : i32
    return %c0_i32, %c0_i32_0 : i32, i32
  }
  func.func @transform_5(%arg0: i32) -> (i32, i32) {
    %c0_i32 = arith.constant 0 : i32
    %c0_i32_0 = arith.constant 0 : i32
    %c0_i32_1 = arith.constant 0 : i32
    return %c0_i32, %c0_i32_0 : i32, i32
  }
  func.func @transform_6(%arg0: i32) -> (i32, i32) {
    %c0_i32 = arith.constant 0 : i32
    %c0_i32_0 = arith.constant 0 : i32
    %c0_i32_1 = arith.constant 0 : i32
    return %c0_i32, %c0_i32_0 : i32, i32
  }
  func.func @transform_7(%arg0: i32) -> (i32, i32) {
    %c0_i32 = arith.constant 0 : i32
    %c0_i32_0 = arith.constant 0 : i32
    return %arg0, %c0_i32 : i32, i32
  }
}

</mosaic_0001>

<llo_original>
// kernel: tpu_custom_call.1
$region0: #{tpu_custom_call.1}
  #allocation0 [shape = 'u32[]', space=smem, size = 0x4, offset = 0x4, fixed_abs, tag = 'smem constant byte address 0x4 - core index']
  #allocation1 [shape = 'u32[144,128]{1,0:T(1,128)}', space=vmem, size = 0x12000, scoped, tag = 'internal scratch']
  %s0 = inlined_call_operand.vmem [shape: f32[16,8], index: 0, kind: input, shape index: {}]
  %s1 = inlined_call_operand.vmem [shape: f32[8,128], index: 1, kind: input, shape index: {}]
  %s2 = inlined_call_operand.vmem [shape: f32[1,128], index: 2, kind: input, shape index: {}]
  %s3 = inlined_call_operand.hbm [shape: f32[128,128], index: 3, kind: input, shape index: {}]
  %s4 = inlined_call_operand.vmem [shape: f32[1,128], index: 4, kind: input, shape index: {}]
  %s5 = inlined_call_operand.hbm [shape: f32[128,128], index: 5, kind: input, shape index: {}]
  %s6 = inlined_call_operand.vmem [shape: f32[1,128], index: 6, kind: input, shape index: {}]
  %s7 = inlined_call_operand.hbm [shape: f32[16,128], index: 7, kind: output, shape index: {}]
  %s8 = sld [smem:[#allocation0]]
  $region46: #{tpu_custom_call.1} parent=0
    _
  %s10 = ssub.s32 1, %s8
  %s11 = scalar_select 0, %s10, %s8
  $region1: #{tpu_custom_call.1} parent=0
    #allocation2 [shape = 'u8[65536]{0}', space=vmem, size = 0x10000, scoped, tag = 'input window, operand 3, single buffered']
    #allocation3 [shape = 's32[1]{0}', space=sflag, size = 0x4, scoped, tag = 'scoped memory for tpu_custom_call.1']
    #allocation4 [shape = 's32[1]{0}', space=sflag, size = 0x4, scoped, tag = 'scoped memory for tpu_custom_call.1']
    #allocation5 [shape = 'u8[65536]{0}', space=vmem, size = 0x10000, scoped, tag = 'input window, operand 5, single buffered']
    #allocation6 [shape = 's32[1]{0}', space=sflag, size = 0x4, scoped, tag = 'scoped memory for tpu_custom_call.1']
    #allocation7 [shape = 'u8[8192]{0}', space=vmem, size = 0x2000, scoped, tag = 'output window, operand 0, single buffered']
    %12 = vsyncpa [#allocation3], 0
    %13 = vsyncpa [#allocation6], 0
    %14 = vsyncpa [#allocation4], 0
    // Predicated region
    $region2: #{tpu_custom_call.1} parent=1 // pred_check
      _
    $region3: #{tpu_custom_call.1} parent=1 // pred_check_branch
      %16 = sbr.rel (0) target = $region5
    $region4: #{tpu_custom_call.1} parent=1 // pred_region
      _
    $region5: #{tpu_custom_call.1} parent=1 // pred_fallthru
      _
    // Predicated region
    $region6: #{tpu_custom_call.1} parent=1 // pred_check
      _
    $region7: #{tpu_custom_call.1} parent=1 // pred_check_branch
      %18 = sbr.rel (0) target = $region9
    $region8: #{tpu_custom_call.1} parent=1 // pred_region
      _
    $region9: #{tpu_custom_call.1} parent=1 // pred_fallthru
      _
    // Predicated region
    $region10: #{tpu_custom_call.1} parent=1 // pred_check
      _
    $region11: #{tpu_custom_call.1} parent=1 // pred_check_branch
      %20 = sbr.rel (0) target = $region13
    $region12: #{tpu_custom_call.1} parent=1 // pred_region
      _
    $region13: #{tpu_custom_call.1} parent=1 // pred_fallthru
      _
    // Predicated region
    $region14: #{tpu_custom_call.1} parent=1 // pred_check
      _
    $region15: #{tpu_custom_call.1} parent=1 // pred_check_branch
      %22 = sbr.rel (0) target = $region17
    $region16: #{tpu_custom_call.1} parent=1 // pred_region
      %s24 = ssub.s32 2048, 2048
      %25 = vsyncadd [#allocation3], %s24
      %s26 = sshll.u32 [#allocation2], 4
      %s27 = int_to_ptr.vmem [resolvable:$true] %s26
      %32 = dma.hbm_to_vmem [thread:$0]  %s3, 2048, %s27, [#allocation3], 128, 128, 8
    $region17: #{tpu_custom_call.1} parent=1 // pred_fallthru
      _
    // Predicated region
    $region18: #{tpu_custom_call.1} parent=1 // pred_check
      _
    $region19: #{tpu_custom_call.1} parent=1 // pred_check_branch
      %34 = sbr.rel (0) target = $region21
    $region20: #{tpu_custom_call.1} parent=1 // pred_region
      _
    $region21: #{tpu_custom_call.1} parent=1 // pred_fallthru
      _
    // Predicated region
    $region22: #{tpu_custom_call.1} parent=1 // pred_check
      _
    $region23: #{tpu_custom_call.1} parent=1 // pred_check_branch
      %36 = sbr.rel (0) target = $region25
    $region24: #{tpu_custom_call.1} parent=1 // pred_region
      %s38 = ssub.s32 2048, 2048
      %39 = vsyncadd [#allocation6], %s38
      %s40 = sshll.u32 [#allocation5], 4
      %s41 = int_to_ptr.vmem [resolvable:$true] %s40
      %46 = dma.hbm_to_vmem [thread:$0]  %s5, 2048, %s41, [#allocation6], 128, 128, 8
    $region25: #{tpu_custom_call.1} parent=1 // pred_fallthru
      _
    // Predicated region
    $region26: #{tpu_custom_call.1} parent=1 // pred_check
      _
    $region27: #{tpu_custom_call.1} parent=1 // pred_check_branch
      %48 = sbr.rel (0) target = $region29
    $region28: #{tpu_custom_call.1} parent=1 // pred_region
      _
    $region29: #{tpu_custom_call.1} parent=1 // pred_fallthru
      _
    // Predicated region
    $region30: #{tpu_custom_call.1} parent=1 // pred_check
      _
    $region31: #{tpu_custom_call.1} parent=1 // pred_check_branch
      %50 = sbr.rel (0) target = $region33
    $region32: #{tpu_custom_call.1} parent=1 // pred_region
      %51 = dma.done [#allocation3], 2048
    $region33: #{tpu_custom_call.1} parent=1 // pred_fallthru
      _
    // Predicated region
    $region34: #{tpu_custom_call.1} parent=1 // pred_check
      _
    $region35: #{tpu_custom_call.1} parent=1 // pred_check_branch
      %53 = sbr.rel (0) target = $region37
    $region36: #{tpu_custom_call.1} parent=1 // pred_region
      %54 = dma.done [#allocation6], 2048
    $region37: #{tpu_custom_call.1} parent=1 // pred_fallthru
      _
    %v55 = vld [vmem:[%s0] sm:$0xff]
    %v56 = vld [vmem:[%s0 + $0x8] sm:$0xff]
    %v57 = vld [vmem:[%s1] sm:$0xff]
    %v58 = vld [vmem:[%s2] sm:$0x1]
    %v60 = vlaneseq
    %v61 = vshrl.u32 %v60, 7
    %v62 = vsub.s32 0, %v61
    %v63 = vrot.slane %v58, %v62
    %vm65 = vcmask 64512
    %v67 = vsel %vm65, %v55, 0
    %v70 = vsel %vm65, %v56, 0
    %72 = vmatprep.subr.mxu0 0.0
    %73 = vmatpush1.msra.mxu0 %v57
    %74 = vmatprep.subr.mxu0 0.0
    %75 = vmatpush1.msra.mxu0 0.0
    %76 = vmatprep.subr.mxu0 0.0
    %77 = vmatpush1.msra.mxu0 0.0
    %78 = vmatprep.subr.mxu0 0.0
    %79 = vmatpush1.msra.mxu0 0.0
    %80 = vmatprep.subr.mxu0 0.0
    %81 = vmatpush1.msra.mxu0 0.0
    %82 = vmatprep.subr.mxu0 0.0
    %83 = vmatpush1.msra.mxu0 0.0
    %84 = vmatprep.subr.mxu0 0.0
    %85 = vmatpush1.msra.mxu0 0.0
    %86 = vmatprep.subr.mxu0 0.0
    %87 = vmatpush1.msra.mxu0 0.0
    %88 = vmatprep.subr.mxu0 0.0
    %89 = vmatpush1.msra.mxu0 0.0
    %90 = vmatprep.subr.mxu0 0.0
    %91 = vmatpush1.msra.mxu0 0.0
    %92 = vmatprep.subr.mxu0 0.0
    %93 = vmatpush1.msra.mxu0 0.0
    %94 = vmatprep.subr.mxu0 0.0
    %95 = vmatpush1.msra.mxu0 0.0
    %96 = vmatprep.subr.mxu0 0.0
    %97 = vmatpush1.msra.mxu0 0.0
    %98 = vmatprep.subr.mxu0 0.0
    %99 = vmatpush1.msra.mxu0 0.0
    %100 = vmatprep.subr.mxu0 0.0
    %101 = vmatpush1.msra.mxu0 0.0
    %102 = vmatprep.subr.mxu0 0.0
    %103 = vmatpush1.msra.mxu0 0.0
    %104 = vmatprep.subr.mxu0 0.0
    %105 = vmatpush1.msra.mxu0 0.0
    %106 = vmatprep.subr.mxu0 0.0
    %107 = vmatpush1.msra.mxu0 0.0
    %108 = vmatprep.subr.mxu0 0.0
    %109 = vmatpush1.msra.mxu0 0.0
    %110 = vmatprep.subr.mxu0 0.0
    %111 = vmatpush1.msra.mxu0 0.0
    %112 = vmatprep.subr.mxu0 0.0
    %113 = vmatpush1.msra.mxu0 0.0
    %114 = vmatprep.subr.mxu0 0.0
    %115 = vmatpush1.msra.mxu0 0.0
    %116 = vmatprep.subr.mxu0 0.0
    %117 = vmatpush1.msra.mxu0 0.0
    %118 = vmatprep.subr.mxu0 0.0
    %119 = vmatpush1.msra.mxu0 0.0
    %120 = vmatprep.subr.mxu0 0.0
    %121 = vmatpush1.msra.mxu0 0.0
    %122 = vmatprep.subr.mxu0 0.0
    %123 = vmatpush1.msra.mxu0 0.0
    %124 = vmatprep.subr.mxu0 0.0
    %125 = vmatpush1.msra.mxu0 0.0
    %126 = vmatprep.subr.mxu0 0.0
    %127 = vmatpush1.msra.mxu0 0.0
    %128 = vmatprep.subr.mxu0 0.0
    %129 = vmatpush1.msra.mxu0 0.0
    %130 = vmatprep.subr.mxu0 0.0
    %131 = vmatpush1.msra.mxu0 0.0
    %132 = vmatprep.subr.mxu0 0.0
    %133 = vmatpush1.msra.mxu0 0.0
    %134 = vmatprep.subr.mxu0 0.0
    %135 = vmatpush1.msra.mxu0 0.0
    %136 = vmatprep.mubr.f32.mxu0 0.0
    %137 = vmatmul.mubr.f32.gmra.mrb[0].mxu0 %v67
    %v138 = vpop.f32.mrb[0].mxu0
    %v139 = vadd.f32 %v63, %v138
    %v140 = vpop.f32.mrb[0].mxu0
    %141 = vmatprep.mubr.f32.mxu0 0.0
    %142 = vmatmul.mubr.f32.gmra.mrb[0].mxu0 %v70
    %v143 = vpop.f32.mrb[0].mxu0
    %v144 = vadd.f32 %v63, %v143
    %v145 = vpop.f32.mrb[0].mxu0
    %146 = vdwg.mxu0
    %v147 = vmax.f32 %v139, 0.0
    %v148 = vmax.f32 %v144, 0.0
    %v149 = vld [vmem:[#allocation2] sm:$0xff]
    %v150 = vld [vmem:[#allocation2 + $0x8] sm:$0xff]
    %v151 = vld [vmem:[#allocation2 + $0x10] sm:$0xff]
    %v152 = vld [vmem:[#allocation2 + $0x18] sm:$0xff]
    %v153 = vld [vmem:[#allocation2 + $0x20] sm:$0xff]
    %v154 = vld [vmem:[#allocation2 + $0x28] sm:$0xff]
    %v155 = vld [vmem:[#allocation2 + $0x30] sm:$0xff]
    %v156 = vld [vmem:[#allocation2 + $0x38] sm:$0xff]
    %v157 = vld [vmem:[#allocation2 + $0x40] sm:$0xff]
    %v158 = vld [vmem:[#allocation2 + $0x48] sm:$0xff]
    %v159 = vld [vmem:[#allocation2 + $0x50] sm:$0xff]
    %v160 = vld [vmem:[#allocation2 + $0x58] sm:$0xff]
    %v161 = vld [vmem:[#allocation2 + $0x60] sm:$0xff]
    %v162 = vld [vmem:[#allocation2 + $0x68] sm:$0xff]
    %v163 = vld [vmem:[#allocation2 + $0x70] sm:$0xff]
    %v164 = vld [vmem:[#allocation2 + $0x78] sm:$0xff]
    %v165 = vld [vmem:[%s4] sm:$0x1]
    %v167 = vlaneseq
    %v168 = vshrl.u32 %v167, 7
    %v169 = vsub.s32 0, %v168
    %v170 = vrot.slane %v165, %v169
    %172 = vmatprep.subr.mxu0 0.0
    %173 = vmatpush1.msra.mxu0 %v149
    %174 = vmatprep.subr.mxu0 0.0
    %175 = vmatpush1.msra.mxu0 %v150
    %176 = vmatprep.subr.mxu0 0.0
    %177 = vmatpush1.msra.mxu0 %v151
    %178 = vmatprep.subr.mxu0 0.0
    %179 = vmatpush1.msra.mxu0 %v152
    %180 = vmatprep.subr.mxu0 0.0
    %181 = vmatpush1.msra.mxu0 %v153
    %182 = vmatprep.subr.mxu0 0.0
    %183 = vmatpush1.msra.mxu0 %v154
    %184 = vmatprep.subr.mxu0 0.0
    %185 = vmatpush1.msra.mxu0 %v155
    %186 = vmatprep.subr.mxu0 0.0
    %187 = vmatpush1.msra.mxu0 %v156
    %188 = vmatprep.subr.mxu0 0.0
    %189 = vmatpush1.msra.mxu0 %v157
    %190 = vmatprep.subr.mxu0 0.0
    %191 = vmatpush1.msra.mxu0 %v158
    %192 = vmatprep.subr.mxu0 0.0
    %193 = vmatpush1.msra.mxu0 %v159
    %194 = vmatprep.subr.mxu0 0.0
    %195 = vmatpush1.msra.mxu0 %v160
    %196 = vmatprep.subr.mxu0 0.0
    %197 = vmatpush1.msra.mxu0 %v161
    %198 = vmatprep.subr.mxu0 0.0
    %199 = vmatpush1.msra.mxu0 %v162
    %200 = vmatprep.subr.mxu0 0.0
    %201 = vmatpush1.msra.mxu0 %v163
    %202 = vmatprep.subr.mxu0 0.0
    %203 = vmatpush1.msra.mxu0 %v164
    %204 = vmatprep.subr.mxu0 0.0
    %205 = vmatpush1.msra.mxu0 0.0
    %206 = vmatprep.subr.mxu0 0.0
    %207 = vmatpush1.msra.mxu0 0.0
    %208 = vmatprep.subr.mxu0 0.0
    %209 = vmatpush1.msra.mxu0 0.0
    %210 = vmatprep.subr.mxu0 0.0
    %211 = vmatpush1.msra.mxu0 0.0
    %212 = vmatprep.subr.mxu0 0.0
    %213 = vmatpush1.msra.mxu0 0.0
    %214 = vmatprep.subr.mxu0 0.0
    %215 = vmatpush1.msra.mxu0 0.0
    %216 = vmatprep.subr.mxu0 0.0
    %217 = vmatpush1.msra.mxu0 0.0
    %218 = vmatprep.subr.mxu0 0.0
    %219 = vmatpush1.msra.mxu0 0.0
    %220 = vmatprep.subr.mxu0 0.0
    %221 = vmatpush1.msra.mxu0 0.0
    %222 = vmatprep.subr.mxu0 0.0
    %223 = vmatpush1.msra.mxu0 0.0
    %224 = vmatprep.subr.mxu0 0.0
    %225 = vmatpush1.msra.mxu0 0.0
    %226 = vmatprep.subr.mxu0 0.0
    %227 = vmatpush1.msra.mxu0 0.0
    %228 = vmatprep.subr.mxu0 0.0
    %229 = vmatpush1.msra.mxu0 0.0
    %230 = vmatprep.subr.mxu0 0.0
    %231 = vmatpush1.msra.mxu0 0.0
    %232 = vmatprep.subr.mxu0 0.0
    %233 = vmatpush1.msra.mxu0 0.0
    %234 = vmatprep.subr.mxu0 0.0
    %235 = vmatpush1.msra.mxu0 0.0
    %236 = vmatprep.mubr.f32.mxu0 0.0
    %237 = vmatmul.mubr.f32.gmra.mrb[0].mxu0 %v147
    %v238 = vpop.f32.mrb[0].mxu0
    %v239 = vadd.f32 %v170, %v238
    %v240 = vpop.f32.mrb[0].mxu0
    %241 = vmatprep.mubr.f32.mxu0 0.0
    %242 = vmatmul.mubr.f32.gmra.mrb[0].mxu0 %v148
    %v243 = vpop.f32.mrb[0].mxu0
    %v244 = vadd.f32 %v170, %v243
    %v245 = vpop.f32.mrb[0].mxu0
    %246 = vdwg.mxu0
    %v247 = vmax.f32 %v239, 0.0
    %v248 = vmax.f32 %v244, 0.0
    %v249 = vld [vmem:[#allocation5] sm:$0xff]
    %v250 = vld [vmem:[#allocation5 + $0x8] sm:$0xff]
    %v251 = vld [vmem:[#allocation5 + $0x10] sm:$0xff]
    %v252 = vld [vmem:[#allocation5 + $0x18] sm:$0xff]
    %v253 = vld [vmem:[#allocation5 + $0x20] sm:$0xff]
    %v254 = vld [vmem:[#allocation5 + $0x28] sm:$0xff]
    %v255 = vld [vmem:[#allocation5 + $0x30] sm:$0xff]
    %v256 = vld [vmem:[#allocation5 + $0x38] sm:$0xff]
    %v257 = vld [vmem:[#allocation5 + $0x40] sm:$0xff]
    %v258 = vld [vmem:[#allocation5 + $0x48] sm:$0xff]
    %v259 = vld [vmem:[#allocation5 + $0x50] sm:$0xff]
    %v260 = vld [vmem:[#allocation5 + $0x58] sm:$0xff]
    %v261 = vld [vmem:[#allocation5 + $0x60] sm:$0xff]
    %v262 = vld [vmem:[#allocation5 + $0x68] sm:$0xff]
    %v263 = vld [vmem:[#allocation5 + $0x70] sm:$0xff]
    %v264 = vld [vmem:[#allocation5 + $0x78] sm:$0xff]
    %v265 = vld [vmem:[%s6] sm:$0x1]
    %v267 = vlaneseq
    %v268 = vshrl.u32 %v267, 7
    %v269 = vsub.s32 0, %v268
    %v270 = vrot.slane %v265, %v269
    %272 = vmatprep.subr.mxu0 0.0
    %273 = vmatpush1.msra.mxu0 %v249
    %274 = vmatprep.subr.mxu0 0.0
    %275 = vmatpush1.msra.mxu0 %v250
    %276 = vmatprep.subr.mxu0 0.0
    %277 = vmatpush1.msra.mxu0 %v251
    %278 = vmatprep.subr.mxu0 0.0
    %279 = vmatpush1.msra.mxu0 %v252
    %280 = vmatprep.subr.mxu0 0.0
    %281 = vmatpush1.msra.mxu0 %v253
    %282 = vmatprep.subr.mxu0 0.0
    %283 = vmatpush1.msra.mxu0 %v254
    %284 = vmatprep.subr.mxu0 0.0
    %285 = vmatpush1.msra.mxu0 %v255
    %286 = vmatprep.subr.mxu0 0.0
    %287 = vmatpush1.msra.mxu0 %v256
    %288 = vmatprep.subr.mxu0 0.0
    %289 = vmatpush1.msra.mxu0 %v257
    %290 = vmatprep.subr.mxu0 0.0
    %291 = vmatpush1.msra.mxu0 %v258
    %292 = vmatprep.subr.mxu0 0.0
    %293 = vmatpush1.msra.mxu0 %v259
    %294 = vmatprep.subr.mxu0 0.0
    %295 = vmatpush1.msra.mxu0 %v260
    %296 = vmatprep.subr.mxu0 0.0
    %297 = vmatpush1.msra.mxu0 %v261
    %298 = vmatprep.subr.mxu0 0.0
    %299 = vmatpush1.msra.mxu0 %v262
    %300 = vmatprep.subr.mxu0 0.0
    %301 = vmatpush1.msra.mxu0 %v263
    %302 = vmatprep.subr.mxu0 0.0
    %303 = vmatpush1.msra.mxu0 %v264
    %304 = vmatprep.subr.mxu0 0.0
    %305 = vmatpush1.msra.mxu0 0.0
    %306 = vmatprep.subr.mxu0 0.0
    %307 = vmatpush1.msra.mxu0 0.0
    %308 = vmatprep.subr.mxu0 0.0
    %309 = vmatpush1.msra.mxu0 0.0
    %310 = vmatprep.subr.mxu0 0.0
    %311 = vmatpush1.msra.mxu0 0.0
    %312 = vmatprep.subr.mxu0 0.0
    %313 = vmatpush1.msra.mxu0 0.0
    %314 = vmatprep.subr.mxu0 0.0
    %315 = vmatpush1.msra.mxu0 0.0
    %316 = vmatprep.subr.mxu0 0.0
    %317 = vmatpush1.msra.mxu0 0.0
    %318 = vmatprep.subr.mxu0 0.0
    %319 = vmatpush1.msra.mxu0 0.0
    %320 = vmatprep.subr.mxu0 0.0
    %321 = vmatpush1.msra.mxu0 0.0
    %322 = vmatprep.subr.mxu0 0.0
    %323 = vmatpush1.msra.mxu0 0.0
    %324 = vmatprep.subr.mxu0 0.0
    %325 = vmatpush1.msra.mxu0 0.0
    %326 = vmatprep.subr.mxu0 0.0
    %327 = vmatpush1.msra.mxu0 0.0
    %328 = vmatprep.subr.mxu0 0.0
    %329 = vmatpush1.msra.mxu0 0.0
    %330 = vmatprep.subr.mxu0 0.0
    %331 = vmatpush1.msra.mxu0 0.0
    %332 = vmatprep.subr.mxu0 0.0
    %333 = vmatpush1.msra.mxu0 0.0
    %334 = vmatprep.subr.mxu0 0.0
    %335 = vmatpush1.msra.mxu0 0.0
    %336 = vmatprep.mubr.f32.mxu0 0.0
    %337 = vmatmul.mubr.f32.gmra.mrb[0].mxu0 %v247
    %v338 = vpop.f32.mrb[0].mxu0
    %v339 = vadd.f32 %v270, %v338
    %v340 = vpop.f32.mrb[0].mxu0
    %341 = vmatprep.mubr.f32.mxu0 0.0
    %342 = vmatmul.mubr.f32.gmra.mrb[0].mxu0 %v248
    %v343 = vpop.f32.mrb[0].mxu0
    %v344 = vadd.f32 %v270, %v343
    %v345 = vpop.f32.mrb[0].mxu0
    %346 = vdwg.mxu0
    %347 = vst [vmem:[#allocation7] sm:$0xff] %v339
    %348 = vst [vmem:[#allocation7 + $0x8] sm:$0xff] %v344
    // Predicated region
    $region38: #{tpu_custom_call.1} parent=1 // pred_check
      _
    $region39: #{tpu_custom_call.1} parent=1 // pred_check_branch
      %350 = sbr.rel (0) target = $region41
    $region40: #{tpu_custom_call.1} parent=1 // pred_region
      %s352 = ssub.s32 256, 256
      %353 = vsyncadd [#allocation4], %s352
      %s354 = sshll.u32 [#allocation7], 4
      %s355 = int_to_ptr.vmem [resolvable:$true] %s354
      %360 = dma.vmem_to_hbm [thread:$0]  %s355, 256, %s7, [#allocation4], 128, 128, 8
    $region41: #{tpu_custom_call.1} parent=1 // pred_fallthru
      _
    // Predicated region
    $region42: #{tpu_custom_call.1} parent=1 // pred_check
      _
    $region43: #{tpu_custom_call.1} parent=1 // pred_check_branch
      %362 = sbr.rel (0) target = $region45
    $region44: #{tpu_custom_call.1} parent=1 // pred_region
      %363 = dma.done [#allocation4], 256
    $region45: #{tpu_custom_call.1} parent=1 // pred_fallthru
      _
    %364 = vsyncpa [#allocation3], 1
    %365 = vsyncpa [#allocation6], 1
    %366 = vsyncpa [#allocation4], 1

</llo_original>
